<compile_context>
chip_gen: v5e
topology: v5e:2x2
jax: 0.10.0
libtpu: 0.0.40
codegen_flags: <defaults>
</compile_context>

<pallas_src>
import jax
import jax.numpy as jnp
from jax.experimental import pallas as pl
from jax.experimental.pallas import tpu as pltpu

LANE = 128
SUBLANE = 8


def _make_loss_kernel(w: float):
    w = float(w)

    def kernel(t0_ref, t1_ref, t2_ref, gt_ref, out_ref, acc_ref):
        i = pl.program_id(1)  # reduction axis (last, "arbitrary")

        @pl.when(i == 0)
        def _():
            acc_ref[...] = jnp.zeros_like(acc_ref)

        gt = gt_ref[...].astype(jnp.float32)
        d0 = t0_ref[...].astype(jnp.float32) - gt
        d1 = t1_ref[...].astype(jnp.float32) - gt
        d2 = t2_ref[...].astype(jnp.float32) - gt

        # Steady state: pure elementwise VPU work into a block-shaped
        # accumulator (no XLU reduce, no scalar RMW chain, no narrow stores).
        tail = d1 * d1 + d2 * d2
        if w != 1.0:
            tail = w * tail
        acc_ref[...] += d0 * d0 + tail

        @pl.when(i == pl.num_programs(1) - 1)
        def _():
            # Single sublane (XLU) reduce + single narrow store, epilogue only.
            out_ref[0, :, :] = jnp.sum(acc_ref[...], axis=0, keepdims=True)

    return kernel


def totall_loss_base_pallas(ts, gt, w: float = 1.0, *,
                            target_block_rows: int = 1024,
                            num_slices: int = 2):
    """ts: tuple/list of 3 arrays, gt: array of identical shape. Returns scalar
    loss(ts[0],gt) + w*loss(ts[1],gt) + w*loss(ts[2],gt) with loss = MSE."""
    t0, t1, t2 = ts
    assert t0.shape == t1.shape == t2.shape == gt.shape
    n = gt.size

    # --- tiling: (block_rows, 128) tiles, `num_slices` parallel row ranges ---
    rows = pl.cdiv(n, LANE)
    # Don't spawn padding-only slices for tiny inputs.
    num_slices = max(1, min(num_slices, pl.cdiv(rows, SUBLANE)))
    rows_per_slice = pl.cdiv(rows, num_slices)
    block_rows = min(target_block_rows, pl.cdiv(rows_per_slice, SUBLANE) * SUBLANE)
    block_rows = max(block_rows, SUBLANE)
    steps = pl.cdiv(rows, num_slices * block_rows)
    padded_rows = num_slices * steps * block_rows
    padded_n = padded_rows * LANE

    def flat(x):
        x = x.reshape(-1)
        if padded_n != n:
            # Zero padding: padded positions give (0-0)^2 = 0, sum unaffected.
            # Aligned inputs skip this branch entirely (pure reshape, no copy).
            x = jnp.pad(x, (0, padded_n - n))
        return x.reshape(padded_rows, LANE)

    t0f, t1f, t2f, gtf = flat(t0), flat(t1), flat(t2), flat(gt)

    in_spec = pl.BlockSpec((block_rows, LANE), lambda j, i: (j * steps + i, 0))
    out_spec = pl.BlockSpec((1, 1, LANE), lambda j, i: (j, 0, 0))

    itemsize = jnp.dtype(gt.dtype).itemsize
    cost = pl.CostEstimate(
        flops=10 * padded_n,
        transcendentals=0,
        bytes_accessed=4 * padded_n * itemsize + num_slices * LANE * 4,
    )

    partial = pl.pallas_call(
        _make_loss_kernel(w),
        out_shape=jax.ShapeDtypeStruct((num_slices, 1, LANE), jnp.float32),
        grid_spec=pltpu.PrefetchScalarGridSpec(
            num_scalar_prefetch=0,
            grid=(num_slices, steps),
            in_specs=[in_spec, in_spec, in_spec, in_spec],
            out_specs=out_spec,
            scratch_shapes=[pltpu.VMEM((block_rows, LANE), jnp.float32)],
        ),
        compiler_params=pltpu.CompilerParams(
            dimension_semantics=("parallel", "arbitrary"),
        ),
        cost_estimate=cost,
    )(t0f, t1f, t2f, gtf)

    # Final tiny reduction of the per-slice (1,128) partials + mean scaling.
    return jnp.sum(partial) * (1.0 / float(n))


def totall_loss_base_ref(ts, gt, w: float = 1.0):
    """Pure-JAX reference mirroring the PyTorch module with nn.MSELoss()."""
    def mse(a, b):
        return jnp.mean((a.astype(jnp.float32) - b.astype(jnp.float32)) ** 2)

    lrds = mse(ts[0], gt)
    lrs = mse(ts[1], gt) * w
    lds = mse(ts[2], gt) * w
    return lrds + lrs + lds


if __name__ == "__main__":
    key = jax.random.PRNGKey(0)
    k0, k1, k2, k3 = jax.random.split(key, 4)

    # Small NCHW shapes consistent with the module's forward.
    B, C, H, W = 2, 4, 16, 16
    shape = (B, C, H, W)

    ts = (
        jax.random.normal(k0, shape, dtype=jnp.float32),
        jax.random.normal(k1, shape, dtype=jnp.float32),
        jax.random.normal(k2, shape, dtype=jnp.float32),
    )
    gt = jax.random.normal(k3, shape, dtype=jnp.float32)

    # Case 1: aligned shape, default weight (zero-copy reshape path).
    out = jax.block_until_ready(totall_loss_base_pallas(ts, gt, w=1.0))
    ref = jax.block_until_ready(totall_loss_base_ref(ts, gt, w=1.0))
    assert jnp.allclose(out, ref, rtol=1e-5, atol=1e-5), (out, ref)

    # Case 2: non-128-aligned shape + non-trivial weight (exercises padding).
    shape2 = (2, 3, 15, 17)
    ts2 = (
        jax.random.normal(k0, shape2, dtype=jnp.float32),
        jax.random.normal(k1, shape2, dtype=jnp.float32),
        jax.random.normal(k2, shape2, dtype=jnp.float32),
    )
    gt2 = jax.random.normal(k3, shape2, dtype=jnp.float32)
    out2 = jax.block_until_ready(totall_loss_base_pallas(ts2, gt2, w=0.7))
    ref2 = jax.block_until_ready(totall_loss_base_ref(ts2, gt2, w=0.7))
    assert jnp.allclose(out2, ref2, rtol=1e-5, atol=1e-5), (out2, ref2)

    print("KERNEL_OK")
</pallas_src>

<mosaic_0001>
module attributes {stable_mosaic.version = 11 : i64} {
  func.func @kernel(%arg0: i32, %arg1: i32, %arg2: memref<8x128xf32, #tpu.memory_space<vmem>>, %arg3: memref<8x128xf32, #tpu.memory_space<vmem>>, %arg4: memref<8x128xf32, #tpu.memory_space<vmem>>, %arg5: memref<8x128xf32, #tpu.memory_space<vmem>>, %arg6: memref<1x1x128xf32, #tpu.memory_space<vmem>>, %arg7: memref<8x128xf32, #tpu.memory_space<vmem>>) attributes {dimension_semantics = [#tpu.dimension_semantics<parallel>, #tpu.dimension_semantics<arbitrary>], iteration_bounds = array<i64: 2, 1>, scalar_prefetch = 0 : i64, scratch_operands = 1 : i64, tpu.core_type = #tpu.core_type<tc>, window_params = [{transform_indices = @transform_0, window_bounds = array<i64: 8, 128>}, {transform_indices = @transform_1, window_bounds = array<i64: 8, 128>}, {transform_indices = @transform_2, window_bounds = array<i64: 8, 128>}, {transform_indices = @transform_3, window_bounds = array<i64: 8, 128>}, {transform_indices = @transform_4, window_bounds = array<i64: 1, 1, 128>}]} {
    %c0_i32 = arith.constant 0 : i32
    %0 = arith.cmpi eq, %arg1, %c0_i32 : i32
    %1 = arith.extui %0 : i1 to i32
    %c0_i32_0 = arith.constant 0 : i32
    %2 = arith.cmpi ne, %1, %c0_i32_0 : i32
    scf.if %2 {
      %cst = arith.constant 0.000000e+00 : f32
      %21 = vector.broadcast %cst : f32 to vector<8x128xf32>
      %c0_14 = arith.constant 0 : index
      %c0_15 = arith.constant 0 : index
      %22 = vector.load %arg7[%c0_14, %c0_15] : memref<8x128xf32, #tpu.memory_space<vmem>>, vector<8x128xf32>
      tpu.vector_store %arg7[%c0_14, %c0_15], %21 {strides = array<i32>} : memref<8x128xf32, #tpu.memory_space<vmem>>, vector<8x128xf32>,
    } else {
    }
    %c0 = arith.constant 0 : index
    %c0_1 = arith.constant 0 : index
    %3 = vector.load %arg5[%c0, %c0_1] : memref<8x128xf32, #tpu.memory_space<vmem>>, vector<8x128xf32>
    %c0_2 = arith.constant 0 : index
    %c0_3 = arith.constant 0 : index
    %4 = vector.load %arg2[%c0_2, %c0_3] : memref<8x128xf32, #tpu.memory_space<vmem>>, vector<8x128xf32>
    %5 = arith.subf %4, %3 : vector<8x128xf32>
    %c0_4 = arith.constant 0 : index
    %c0_5 = arith.constant 0 : index
    %6 = vector.load %arg3[%c0_4, %c0_5] : memref<8x128xf32, #tpu.memory_space<vmem>>, vector<8x128xf32>
    %7 = arith.subf %6, %3 : vector<8x128xf32>
    %c0_6 = arith.constant 0 : index
    %c0_7 = arith.constant 0 : index
    %8 = vector.load %arg4[%c0_6, %c0_7] : memref<8x128xf32, #tpu.memory_space<vmem>>, vector<8x128xf32>
    %9 = arith.subf %8, %3 : vector<8x128xf32>
    %10 = arith.mulf %7, %7 : vector<8x128xf32>
    %11 = arith.mulf %9, %9 : vector<8x128xf32>
    %12 = arith.addf %10, %11 : vector<8x128xf32>
    %c0_8 = arith.constant 0 : index
    %c0_9 = arith.constant 0 : index
    %13 = vector.load %arg7[%c0_8, %c0_9] : memref<8x128xf32, #tpu.memory_space<vmem>>, vector<8x128xf32>
    %14 = arith.mulf %5, %5 : vector<8x128xf32>
    %15 = arith.addf %14, %12 : vector<8x128xf32>
    %16 = arith.addf %13, %15 : vector<8x128xf32>
    %c0_10 = arith.constant 0 : index
    %c0_11 = arith.constant 0 : index
    %17 = vector.load %arg7[%c0_10, %c0_11] : memref<8x128xf32, #tpu.memory_space<vmem>>, vector<8x128xf32>
    tpu.vector_store %arg7[%c0_10, %c0_11], %16 {strides = array<i32>} : memref<8x128xf32, #tpu.memory_space<vmem>>, vector<8x128xf32>,
    %c0_i32_12 = arith.constant 0 : i32
    %18 = arith.cmpi eq, %arg1, %c0_i32_12 : i32
    %19 = arith.extui %18 : i1 to i32
    %c0_i32_13 = arith.constant 0 : i32
    %20 = arith.cmpi ne, %19, %c0_i32_13 : i32
    scf.if %20 {
      %c0_14 = arith.constant 0 : index
      %c0_15 = arith.constant 0 : index
      %21 = vector.load %arg7[%c0_14, %c0_15] : memref<8x128xf32, #tpu.memory_space<vmem>>, vector<8x128xf32>
      %cst = arith.constant dense<0.000000e+00> : vector<128xf32>
      %22 = vector.multi_reduction <add>, %21, %cst [0] : vector<8x128xf32> to vector<128xf32>
      %23 = vector.shape_cast %22 : vector<128xf32> to vector<1x128xf32>
      %c0_16 = arith.constant 0 : index
      %c0_17 = arith.constant 0 : index
      %c0_18 = arith.constant 0 : index
      %24 = vector.load %arg6[%c0_16, %c0_17, %c0_18] : memref<1x1x128xf32, #tpu.memory_space<vmem>>, vector<1x1x128xf32>
      %25 = vector.shape_cast %24 : vector<1x1x128xf32> to vector<1x128xf32>
      %26 = vector.shape_cast %23 : vector<1x128xf32> to vector<1x1x128xf32>
      tpu.vector_store %arg6[%c0_16, %c0_17, %c0_18], %26 {strides = array<i32>} : memref<1x1x128xf32, #tpu.memory_space<vmem>>, vector<1x1x128xf32>,
    } else {
    }
    return
  }
  func.func @transform_0(%arg0: i32, %arg1: i32) -> (i32, i32) {
    %c1_i32 = arith.constant 1 : i32
    %0 = arith.muli %arg0, %c1_i32 : i32
    %1 = arith.addi %0, %arg1 : i32
    %c0_i32 = arith.constant 0 : i32
    %c0_i32_0 = arith.constant 0 : i32
    return %1, %c0_i32 : i32, i32
  }
  func.func @transform_1(%arg0: i32, %arg1: i32) -> (i32, i32) {
    %c1_i32 = arith.constant 1 : i32
    %0 = arith.muli %arg0, %c1_i32 : i32
    %1 = arith.addi %0, %arg1 : i32
    %c0_i32 = arith.constant 0 : i32
    %c0_i32_0 = arith.constant 0 : i32
    return %1, %c0_i32 : i32, i32
  }
  func.func @transform_2(%arg0: i32, %arg1: i32) -> (i32, i32) {
    %c1_i32 = arith.constant 1 : i32
    %0 = arith.muli %arg0, %c1_i32 : i32
    %1 = arith.addi %0, %arg1 : i32
    %c0_i32 = arith.constant 0 : i32
    %c0_i32_0 = arith.constant 0 : i32
    return %1, %c0_i32 : i32, i32
  }
  func.func @transform_3(%arg0: i32, %arg1: i32) -> (i32, i32) {
    %c1_i32 = arith.constant 1 : i32
    %0 = arith.muli %arg0, %c1_i32 : i32
    %1 = arith.addi %0, %arg1 : i32
    %c0_i32 = arith.constant 0 : i32
    %c0_i32_0 = arith.constant 0 : i32
    return %1, %c0_i32 : i32, i32
  }
  func.func @transform_4(%arg0: i32, %arg1: i32) -> (i32, i32, i32) {
    %c0_i32 = arith.constant 0 : i32
    %c0_i32_0 = arith.constant 0 : i32
    %c0_i32_1 = arith.constant 0 : i32
    return %arg0, %c0_i32, %c0_i32_0 : i32, i32, i32
  }
}

</mosaic_0001>

<llo_original>
// kernel: tpu_custom_call.1
$region0: #{tpu_custom_call.1}
  #allocation0 [shape = 'u32[]', space=smem, size = 0x4, offset = 0x4, fixed_abs, tag = 'smem constant byte address 0x4 - core index']
  #allocation1 [shape = 'u32[72,128]{1,0:T(1,128)}', space=vmem, size = 0x9000, scoped, tag = 'internal scratch']
  #allocation2 [shape = 'f32[8,128]{1,0:T(8,128)}', space=vmem, size = 0x1000, scoped, tag = 'scratch operand']
  %s0 = inlined_call_operand.hbm [shape: f32[16,128], index: 0, kind: input, shape index: {}]
  %s1 = inlined_call_operand.hbm [shape: f32[16,128], index: 1, kind: input, shape index: {}]
  %s2 = inlined_call_operand.hbm [shape: f32[16,128], index: 2, kind: input, shape index: {}]
  %s3 = inlined_call_operand.hbm [shape: f32[16,128], index: 3, kind: input, shape index: {}]
  %s4 = inlined_call_operand.hbm [shape: f32[2,1,128], index: 4, kind: output, shape index: {}]
  %s5 = sld [smem:[#allocation0]]
  $region73: #{tpu_custom_call.1} parent=0
    _
  %s7 = ssub.s32 1, %s5
  %s8 = scalar_select 0, %s7, %s5
  $region1: #{tpu_custom_call.1} parent=0
    #allocation3 [shape = 'u8[8192]{0}', space=vmem, size = 0x2000, scoped, tag = 'input window, operand 0']
    #allocation4 [shape = 's32[2]{0}', space=sflag, size = 0x8, scoped, tag = 'scoped memory for tpu_custom_call.1']
    #allocation5 [shape = 's32[2]{0}', space=sflag, size = 0x8, scoped, tag = 'scoped memory for tpu_custom_call.1']
    #allocation6 [shape = 'u8[8192]{0}', space=vmem, size = 0x2000, scoped, tag = 'input window, operand 1']
    #allocation7 [shape = 's32[2]{0}', space=sflag, size = 0x8, scoped, tag = 'scoped memory for tpu_custom_call.1']
    #allocation8 [shape = 'u8[8192]{0}', space=vmem, size = 0x2000, scoped, tag = 'input window, operand 2']
    #allocation9 [shape = 'u8[8192]{0}', space=vmem, size = 0x2000, scoped, tag = 'input window, operand 3']
    #allocation10 [shape = 's32[2]{0}', space=sflag, size = 0x8, scoped, tag = 'scoped memory for tpu_custom_call.1']
    #allocation11 [shape = 'u8[1024]{0}', space=vmem, size = 0x400, scoped, tag = 'output window, operand 0']
    %9 = vsyncpa [#allocation4], 0
    %s10 = scalar_lea.sflag [#allocation4], 1
    %11 = vsyncpa %s10, 0
    %12 = vsyncpa [#allocation7], 0
    %s13 = scalar_lea.sflag [#allocation7], 1
    %14 = vsyncpa %s13, 0
    %15 = vsyncpa [#allocation10], 0
    %s16 = scalar_lea.sflag [#allocation10], 1
    %17 = vsyncpa %s16, 0
    %18 = vsyncpa [#allocation5], 0
    %s19 = scalar_lea.sflag [#allocation5], 1
    %20 = vsyncpa %s19, 0
    loop: start=0, step=1, limit=4
    $region2: #{tpu_custom_call.1} parent=1 // loop_pre_header
      _
    $region3: #{tpu_custom_call.1} parent=1 // loop_header
      %s22 = sphi 0, %s26
      %p23 = scmp.ge.s32.totalorder %s22, 4
      %s29 = sphi 0, %s41
      %s30 = sphi 0, %s37
      %s31 = sphi 0, %s29
      %s32 = sphi 0, %s30
      %s33 = sphi 0, %s31
      %s34 = sphi 0, %s32
      %s46 = sphi 0, %s48
      %s49 = sphi 0, %s46
      %s50 = sphi 0, %s49
      %s66 = sphi 0, %s50
      %s74 = sphi 0, %s76
      %s77 = sphi 0, %s74
      %s78 = sphi 0, %s77
      %s94 = sphi 0, %s78
      %s102 = sphi 0, %s104
      %s105 = sphi 0, %s102
      %s106 = sphi 0, %s105
      %s122 = sphi 0, %s106
      %s130 = sphi 0, %s132
      %s133 = sphi 0, %s130
      %s134 = sphi 0, %s133
      %s150 = sphi 0, %s134
      %s156 = sphi 0, %s158
      %s159 = sphi 0, %s156
      %s160 = sphi 0, %s159
      %s176 = sphi 0, %s160
    $region4: #{tpu_custom_call.1} parent=1 // loop_header_branch
      %25 = sbr.rel (%p23) target = $region8
    $region5: #{tpu_custom_call.1} parent=1 // loop_body
      %s27 = ssub.s32 %s22, 1
      %s28 = ssub.s32 %s22, 2
      %s35 = sadd.s32 1, %s30
      %p36 = scmp.ge.s32.totalorder %s35, 1
      %s37 = scalar_select %p36, 0, %s35
      %s38 = sadd.s32 1, %s29
      %s39 = scalar_select %p36, %s38, %s29
      %p40 = scmp.ge.s32.totalorder %s39, 2
      %s41 = scalar_select %p40, 0, %s39
      %s42 = sadd.s32 %s29, %s30
      %s43 = sadd.s32 %s41, %s37
      %s44 = ssub.s32 %s42, %s43
      %p45 = scmp.eq.s32.totalorder %s44, 0
      %s47 = sadd.s32 %s46, 1
      %s48 = scalar_select %p45, %s46, %s47
      %p51 = pneg %p45
      %p52 = scmp.eq.s32.totalorder %s22, 1
      %p53 = por %p51, %p52
      %p54 = scmp.ne.s32.totalorder %s46, %s49
      %p55 = scmp.eq.s32.totalorder %s22, 0
      %p56 = por %p54, %p55
      %p57 = scmp.ne.s32.totalorder %s46, %s49
      %p58 = scmp.eq.s32.totalorder %s27, 1
      %p59 = por %p57, %p58
      %p60 = scmp.ne.s32.totalorder %s49, %s50
      %p61 = scmp.eq.s32.totalorder %s27, 0
      %p62 = por %p60, %p61
      %p63 = scmp.ne.s32.totalorder %s49, %s50
      %p64 = scmp.eq.s32.totalorder %s28, 1
      %p65 = por %p63, %p64
      %p67 = scmp.ne.s32.totalorder %s50, %s66
      %p68 = scmp.eq.s32.totalorder %s28, 0
      %p69 = por %p67, %p68
      %s70 = sadd.s32 %s29, %s30
      %s71 = sadd.s32 %s41, %s37
      %s72 = ssub.s32 %s70, %s71
      %p73 = scmp.eq.s32.totalorder %s72, 0
      %s75 = sadd.s32 %s74, 1
      %s76 = scalar_select %p73, %s74, %s75
      %p79 = pneg %p73
      %p80 = scmp.eq.s32.totalorder %s22, 1
      %p81 = por %p79, %p80
      %p82 = scmp.ne.s32.totalorder %s74, %s77
      %p83 = scmp.eq.s32.totalorder %s22, 0
      %p84 = por %p82, %p83
      %p85 = scmp.ne.s32.totalorder %s74, %s77
      %p86 = scmp.eq.s32.totalorder %s27, 1
      %p87 = por %p85, %p86
      %p88 = scmp.ne.s32.totalorder %s77, %s78
      %p89 = scmp.eq.s32.totalorder %s27, 0
      %p90 = por %p88, %p89
      %p91 = scmp.ne.s32.totalorder %s77, %s78
      %p92 = scmp.eq.s32.totalorder %s28, 1
      %p93 = por %p91, %p92
      %p95 = scmp.ne.s32.totalorder %s78, %s94
      %p96 = scmp.eq.s32.totalorder %s28, 0
      %p97 = por %p95, %p96
      %s98 = sadd.s32 %s29, %s30
      %s99 = sadd.s32 %s41, %s37
      %s100 = ssub.s32 %s98, %s99
      %p101 = scmp.eq.s32.totalorder %s100, 0
      %s103 = sadd.s32 %s102, 1
      %s104 = scalar_select %p101, %s102, %s103
      %p107 = pneg %p101
      %p108 = scmp.eq.s32.totalorder %s22, 1
      %p109 = por %p107, %p108
      %p110 = scmp.ne.s32.totalorder %s102, %s105
      %p111 = scmp.eq.s32.totalorder %s22, 0
      %p112 = por %p110, %p111
      %p113 = scmp.ne.s32.totalorder %s102, %s105
      %p114 = scmp.eq.s32.totalorder %s27, 1
      %p115 = por %p113, %p114
      %p116 = scmp.ne.s32.totalorder %s105, %s106
      %p117 = scmp.eq.s32.totalorder %s27, 0
      %p118 = por %p116, %p117
      %p119 = scmp.ne.s32.totalorder %s105, %s106
      %p120 = scmp.eq.s32.totalorder %s28, 1
      %p121 = por %p119, %p120
      %p123 = scmp.ne.s32.totalorder %s106, %s122
      %p124 = scmp.eq.s32.totalorder %s28, 0
      %p125 = por %p123, %p124
      %s126 = sadd.s32 %s29, %s30
      %s127 = sadd.s32 %s41, %s37
      %s128 = ssub.s32 %s126, %s127
      %p129 = scmp.eq.s32.totalorder %s128, 0
      %s131 = sadd.s32 %s130, 1
      %s132 = scalar_select %p129, %s130, %s131
      %p135 = pneg %p129
      %p136 = scmp.eq.s32.totalorder %s22, 1
      %p137 = por %p135, %p136
      %p138 = scmp.ne.s32.totalorder %s130, %s133
      %p139 = scmp.eq.s32.totalorder %s22, 0
      %p140 = por %p138, %p139
      %p141 = scmp.ne.s32.totalorder %s130, %s133
      %p142 = scmp.eq.s32.totalorder %s27, 1
      %p143 = por %p141, %p142
      %p144 = scmp.ne.s32.totalorder %s133, %s134
      %p145 = scmp.eq.s32.totalorder %s27, 0
      %p146 = por %p144, %p145
      %p147 = scmp.ne.s32.totalorder %s133, %s134
      %p148 = scmp.eq.s32.totalorder %s28, 1
      %p149 = por %p147, %p148
      %p151 = scmp.ne.s32.totalorder %s134, %s150
      %p152 = scmp.eq.s32.totalorder %s28, 0
      %p153 = por %p151, %p152
      %s154 = ssub.s32 %s29, %s41
      %p155 = scmp.eq.s32.totalorder %s154, 0
      %s157 = sadd.s32 %s156, 1
      %s158 = scalar_select %p155, %s156, %s157
      %p161 = pneg %p155
      %p162 = scmp.eq.s32.totalorder %s22, 1
      %p163 = por %p161, %p162
      %p164 = scmp.ne.s32.totalorder %s156, %s159
      %p165 = scmp.eq.s32.totalorder %s22, 0
      %p166 = por %p164, %p165
      %p167 = scmp.ne.s32.totalorder %s156, %s159
      %p168 = scmp.eq.s32.totalorder %s27, 1
      %p169 = por %p167, %p168
      %p170 = scmp.ne.s32.totalorder %s159, %s160
      %p171 = scmp.eq.s32.totalorder %s27, 0
      %p172 = por %p170, %p171
      %p173 = scmp.ne.s32.totalorder %s159, %s160
      %p174 = scmp.eq.s32.totalorder %s28, 1
      %p175 = por %p173, %p174
      %p177 = scmp.ne.s32.totalorder %s160, %s176
      %p178 = scmp.eq.s32.totalorder %s28, 0
      %p179 = por %p177, %p178
      %p180 = scmp.le.s32.totalorder 1, %s22
      %p181 = scmp.lt.s32.totalorder %s22, 3
      %p182 = pnand %p180, %p181
      %p183 = pneg %p182
      // Predicated region
      $region9: #{tpu_custom_call.1} parent=5 // pred_check
        _
      $region10: #{tpu_custom_call.1} parent=5 // pred_check_branch
        %185 = sbr.rel (%p182) target = $region12
      $region11: #{tpu_custom_call.1} parent=5 // pred_region
        %s186 = ssub.s32 %s22, 1
      $region12: #{tpu_custom_call.1} parent=5 // pred_fallthru
        _
      %p187 = scmp.lt.s32.totalorder %s22, 2
      // Predicated region
      $region13: #{tpu_custom_call.1} parent=5 // pred_check
        %p188 = pneg %p187
      $region14: #{tpu_custom_call.1} parent=5 // pred_check_branch
        %190 = sbr.rel (%p188) target = $region16
      $region15: #{tpu_custom_call.1} parent=5 // pred_region
        // Predicated region
        $region17: #{tpu_custom_call.1} parent=15 // pred_check
          %p191 = pneg %p56
        $region18: #{tpu_custom_call.1} parent=15 // pred_check_branch
          %193 = sbr.rel (%p191) target = $region20
        $region19: #{tpu_custom_call.1} parent=15 // pred_region
          %s194 = sand.u32 %s46, 1
          %s195 = scalar_lea.sflag [#allocation4], %s194
          %s196 = sand.u32 %s46, 1
          %s197 = smul.addr %s196, 8
          %s198 = scalar_lea.vmem [#allocation3], %s197
          %s199 = sadd.s32 %s29, %s30
          %201 = vsyncadd %s195, 0
          %s202 = smul.addr %s199, 8
          %s203 = scalar_lea.hbm %s0, %s202
          %s205 = sshll.u32 %s203, 4
          %s206 = int_to_ptr.hbm [resolvable:$true] %s205
          %s207 = sshll.u32 %s198, 4
          %s208 = int_to_ptr.vmem [resolvable:$true] %s207
          %210 = dma.hbm_to_vmem [thread:$0]  %s206, 128, %s208, %s195
        $region20: #{tpu_custom_call.1} parent=15 // pred_fallthru
          _
        // Predicated region
        $region21: #{tpu_custom_call.1} parent=15 // pred_check
          %p211 = pneg %p84
        $region22: #{tpu_custom_call.1} parent=15 // pred_check_branch
          %213 = sbr.rel (%p211) target = $region24
        $region23: #{tpu_custom_call.1} parent=15 // pred_region
          %s214 = sand.u32 %s22, 1
          %s215 = scalar_lea.sflag [#allocation7], %s214
          %s216 = sand.u32 %s74, 1
          %s217 = smul.addr %s216, 8
          %s218 = scalar_lea.vmem [#allocation6], %s217
          %s219 = sadd.s32 %s29, %s30
          %221 = vsyncadd %s215, 0
          %s222 = smul.addr %s219, 8
          %s223 = scalar_lea.hbm %s1, %s222
          %s225 = sshll.u32 %s223, 4
          %s226 = int_to_ptr.hbm [resolvable:$true] %s225
          %s227 = sshll.u32 %s218, 4
          %s228 = int_to_ptr.vmem [resolvable:$true] %s227
          %230 = dma.hbm_to_vmem [thread:$0]  %s226, 128, %s228, %s215
        $region24: #{tpu_custom_call.1} parent=15 // pred_fallthru
          _
        // Predicated region
        $region25: #{tpu_custom_call.1} parent=15 // pred_check
          %p231 = pneg %p112
        $region26: #{tpu_custom_call.1} parent=15 // pred_check_branch
          %233 = sbr.rel (%p231) target = $region28
        $region27: #{tpu_custom_call.1} parent=15 // pred_region
          %s234 = sand.u32 %s22, 1
          %s235 = scalar_lea.sflag [#allocation7], %s234
          %s236 = sand.u32 %s102, 1
          %s237 = smul.addr %s236, 8
          %s238 = scalar_lea.vmem [#allocation8], %s237
          %s239 = sadd.s32 %s29, %s30
          %241 = vsyncadd %s235, 0
          %s242 = smul.addr %s239, 8
          %s243 = scalar_lea.hbm %s2, %s242
          %s245 = sshll.u32 %s243, 4
          %s246 = int_to_ptr.hbm [resolvable:$true] %s245
          %s247 = sshll.u32 %s238, 4
          %s248 = int_to_ptr.vmem [resolvable:$true] %s247
          %250 = dma.hbm_to_vmem [thread:$0]  %s246, 128, %s248, %s235
        $region28: #{tpu_custom_call.1} parent=15 // pred_fallthru
          _
        // Predicated region
        $region29: #{tpu_custom_call.1} parent=15 // pred_check
          %p251 = pneg %p140
        $region30: #{tpu_custom_call.1} parent=15 // pred_check_branch
          %253 = sbr.rel (%p251) target = $region32
        $region31: #{tpu_custom_call.1} parent=15 // pred_region
          %s254 = sand.u32 %s130, 1
          %s255 = scalar_lea.sflag [#allocation10], %s254
          %s256 = sand.u32 %s130, 1
          %s257 = smul.addr %s256, 8
          %s258 = scalar_lea.vmem [#allocation9], %s257
          %s259 = sadd.s32 %s29, %s30
          %261 = vsyncadd %s255, 0
          %s262 = smul.addr %s259, 8
          %s263 = scalar_lea.hbm %s3, %s262
          %s265 = sshll.u32 %s263, 4
          %s266 = int_to_ptr.hbm [resolvable:$true] %s265
          %s267 = sshll.u32 %s258, 4
          %s268 = int_to_ptr.vmem [resolvable:$true] %s267
          %270 = dma.hbm_to_vmem [thread:$0]  %s266, 128, %s268, %s255
        $region32: #{tpu_custom_call.1} parent=15 // pred_fallthru
          _
      $region16: #{tpu_custom_call.1} parent=5 // pred_fallthru
        _
      %p271 = scmp.le.s32.totalorder 1, %s22
      %p272 = scmp.lt.s32.totalorder %s22, 3
      %p273 = pnand %p271, %p272
      %p274 = pneg %p273
      // Predicated region
      $region33: #{tpu_custom_call.1} parent=5 // pred_check
        _
      $region34: #{tpu_custom_call.1} parent=5 // pred_check_branch
        %276 = sbr.rel (%p273) target = $region36
      $region35: #{tpu_custom_call.1} parent=5 // pred_region
        %s277 = ssub.s32 %s22, 1
        %s278 = sand.u32 %s49, 1
        %s279 = scalar_lea.sflag [#allocation4], %s278
        %s280 = sand.u32 %s49, 1
        %s281 = smul.addr %s280, 8
        %s282 = scalar_lea.vmem [#allocation3], %s281
        // Predicated region
        $region37: #{tpu_custom_call.1} parent=35 // pred_check
          %p283 = pneg %p62
        $region38: #{tpu_custom_call.1} parent=35 // pred_check_branch
          %285 = sbr.rel (%p283) target = $region40
        $region39: #{tpu_custom_call.1} parent=35 // pred_region
          %287 = dma.done %s279, 128
        $region40: #{tpu_custom_call.1} parent=35 // pred_fallthru
          _
        %s288 = sand.u32 %s27, 1
        %s289 = scalar_lea.sflag [#allocation7], %s288
        %s290 = sand.u32 %s77, 1
        %s291 = smul.addr %s290, 8
        %s292 = scalar_lea.vmem [#allocation6], %s291
        // Predicated region
        $region41: #{tpu_custom_call.1} parent=35 // pred_check
          %p293 = pneg %p90
        $region42: #{tpu_custom_call.1} parent=35 // pred_check_branch
          %295 = sbr.rel (%p293) target = $region44
        $region43: #{tpu_custom_call.1} parent=35 // pred_region
          %297 = dma.done %s289, 128
        $region44: #{tpu_custom_call.1} parent=35 // pred_fallthru
          _
        %s298 = sand.u32 %s27, 1
        %s299 = scalar_lea.sflag [#allocation7], %s298
        %s300 = sand.u32 %s105, 1
        %s301 = smul.addr %s300, 8
        %s302 = scalar_lea.vmem [#allocation8], %s301
        // Predicated region
        $region45: #{tpu_custom_call.1} parent=35 // pred_check
          %p303 = pneg %p118
        $region46: #{tpu_custom_call.1} parent=35 // pred_check_branch
          %305 = sbr.rel (%p303) target = $region48
        $region47: #{tpu_custom_call.1} parent=35 // pred_region
          %307 = dma.done %s299, 128
        $region48: #{tpu_custom_call.1} parent=35 // pred_fallthru
          _
        %s308 = sand.u32 %s133, 1
        %s309 = scalar_lea.sflag [#allocation10], %s308
        %s310 = sand.u32 %s133, 1
        %s311 = smul.addr %s310, 8
        %s312 = scalar_lea.vmem [#allocation9], %s311
        // Predicated region
        $region49: #{tpu_custom_call.1} parent=35 // pred_check
          %p313 = pneg %p146
        $region50: #{tpu_custom_call.1} parent=35 // pred_check_branch
          %315 = sbr.rel (%p313) target = $region52
        $region51: #{tpu_custom_call.1} parent=35 // pred_region
          %317 = dma.done %s309, 128
        $region52: #{tpu_custom_call.1} parent=35 // pred_fallthru
          _
        %s318 = sand.u32 %s49, 1
        %s319 = scalar_lea.sflag [#allocation4], %s318
        %s320 = sand.u32 %s49, 1
        %s321 = smul.addr %s320, 8
        %s322 = scalar_lea.vmem [#allocation3], %s321
        %p323 = pneg %p62
        %p324 = pneg %p59
        %s325 = sand.u32 %s27, 1
        %s326 = scalar_lea.sflag [#allocation7], %s325
        %s327 = sand.u32 %s77, 1
        %s328 = smul.addr %s327, 8
        %s329 = scalar_lea.vmem [#allocation6], %s328
        %p330 = pneg %p90
        %p331 = pneg %p87
        %s332 = sand.u32 %s27, 1
        %s333 = scalar_lea.sflag [#allocation7], %s332
        %s334 = sand.u32 %s105, 1
        %s335 = smul.addr %s334, 8
        %s336 = scalar_lea.vmem [#allocation8], %s335
        %p337 = pneg %p118
        %p338 = pneg %p115
        %s339 = sand.u32 %s133, 1
        %s340 = scalar_lea.sflag [#allocation10], %s339
        %s341 = sand.u32 %s133, 1
        %s342 = smul.addr %s341, 8
        %s343 = scalar_lea.vmem [#allocation9], %s342
        %p344 = pneg %p146
        %p345 = pneg %p143
        %p346 = pneg %p172
        %p347 = pneg %p169
        %s348 = sand.u32 %s159, 1
        %s349 = scalar_lea.sflag [#allocation5], %s348
        %s350 = sand.u32 %s159, 1
        %s351 = scalar_lea.vmem [#allocation11], %s350
        %s352 = sadd.s32 %s31, %s32
        %s353 = sadd.s32 %s31, %s32
        %s354 = sadd.s32 %s31, %s32
        %s355 = sadd.s32 %s31, %s32
        %p356 = scmp.eq.s32.totalorder %s32, 0
        // Predicated region
        $region53: #{tpu_custom_call.1} parent=35 // pred_check
          %p357 = pneg %p356
        $region54: #{tpu_custom_call.1} parent=35 // pred_check_branch
          %359 = sbr.rel (%p357) target = $region56
        $region55: #{tpu_custom_call.1} parent=35 // pred_region
          %360 = vst [vmem:[#allocation2] sm:$0xff] 0.0
        $region56: #{tpu_custom_call.1} parent=35 // pred_fallthru
          _
        %v361 = vld [vmem:[%s312] sm:$0xff]
        %v362 = vld [vmem:[%s282] sm:$0xff]
        %v363 = vsub.f32 %v362, %v361
        %v364 = vld [vmem:[%s292] sm:$0xff]
        %v365 = vsub.f32 %v364, %v361
        %v366 = vld [vmem:[%s302] sm:$0xff]
        %v367 = vsub.f32 %v366, %v361
        %v368 = vmul.f32 %v365, %v365
        %v369 = vmul.f32 %v367, %v367
        %v370 = vadd.f32 %v368, %v369
        %v371 = vld [vmem:[#allocation2] sm:$0xff]
        %v372 = vmul.f32 %v363, %v363
        %v373 = vadd.f32 %v372, %v370
        %v374 = vadd.f32 %v371, %v373
        %375 = vst [vmem:[#allocation2] sm:$0xff] %v374
        // Predicated region
        $region57: #{tpu_custom_call.1} parent=35 // pred_check
          %p376 = pneg %p356
        $region58: #{tpu_custom_call.1} parent=35 // pred_check_branch
          %378 = sbr.rel (%p376) target = $region60
        $region59: #{tpu_custom_call.1} parent=35 // pred_region
          %v379 = vld [vmem:[#allocation2] sm:$0xff]
          %v380 = vrot.slane %v379, 4
          %v381 = vadd.f32 %v379, %v380
          %v382 = vrot.slane %v381, 2
          %v383 = vadd.f32 %v381, %v382
          %v384 = vrot.slane %v383, 1
          %v385 = vadd.f32 %v383, %v384
          %386 = vst [vmem:[%s351] sm:$0x1] %v385
        $region60: #{tpu_custom_call.1} parent=35 // pred_fallthru
          _
        %s387 = sand.u32 %s159, 1
        %s388 = scalar_lea.sflag [#allocation5], %s387
        %s389 = sand.u32 %s159, 1
        %s390 = scalar_lea.vmem [#allocation11], %s389
        // Predicated region
        $region61: #{tpu_custom_call.1} parent=35 // pred_check
          %p391 = pneg %p169
        $region62: #{tpu_custom_call.1} parent=35 // pred_check_branch
          %393 = sbr.rel (%p391) target = $region64
        $region63: #{tpu_custom_call.1} parent=35 // pred_region
          %395 = vsyncadd %s388, 0
          %s396 = scalar_lea.hbm %s4, %s31
          %s398 = sshll.u32 %s390, 4
          %s399 = int_to_ptr.vmem [resolvable:$true] %s398
          %s400 = sshll.u32 %s396, 4
          %s401 = int_to_ptr.hbm [resolvable:$true] %s400
          %403 = dma.vmem_to_hbm [thread:$0]  %s399, 16, %s401, %s388
        $region64: #{tpu_custom_call.1} parent=35 // pred_fallthru
          _
      $region36: #{tpu_custom_call.1} parent=5 // pred_fallthru
        _
      %p404 = scmp.le.s32.totalorder 2, %s22
      // Predicated region
      $region65: #{tpu_custom_call.1} parent=5 // pred_check
        %p405 = pneg %p404
      $region66: #{tpu_custom_call.1} parent=5 // pred_check_branch
        %407 = sbr.rel (%p405) target = $region68
      $region67: #{tpu_custom_call.1} parent=5 // pred_region
        %s408 = ssub.s32 %s22, 2
        // Predicated region
        $region69: #{tpu_custom_call.1} parent=67 // pred_check
          %p409 = pneg %p175
        $region70: #{tpu_custom_call.1} parent=67 // pred_check_branch
          %411 = sbr.rel (%p409) target = $region72
        $region71: #{tpu_custom_call.1} parent=67 // pred_region
          %s412 = sand.u32 %s160, 1
          %s413 = scalar_lea.sflag [#allocation5], %s412
          %s414 = sand.u32 %s160, 1
          %s415 = scalar_lea.vmem [#allocation11], %s414
          %417 = dma.done %s413, 16
        $region72: #{tpu_custom_call.1} parent=67 // pred_fallthru
          _
      $region68: #{tpu_custom_call.1} parent=5 // pred_fallthru
        _
    $region6: #{tpu_custom_call.1} parent=1 // loop_footer
      %s26 = sadd.s32 1, %s22
    $region7: #{tpu_custom_call.1} parent=1 // loop_footer_branch
      %21 = sbr.rel target = $region3
    $region8: #{tpu_custom_call.1} parent=1 // loop_exit
      _
    %418 = vsyncpa [#allocation4], 1
    %s419 = scalar_lea.sflag [#allocation4], 1
    %420 = vsyncpa %s419, 1
    %421 = vsyncpa [#allocation7], 1
    %s422 = scalar_lea.sflag [#allocation7], 1
    %423 = vsyncpa %s422, 1
    %424 = vsyncpa [#allocation10], 1
    %s425 = scalar_lea.sflag [#allocation10], 1
    %426 = vsyncpa %s425, 1
    %427 = vsyncpa [#allocation5], 1
    %s428 = scalar_lea.sflag [#allocation5], 1
    %429 = vsyncpa %s428, 1

</llo_original>
